<compile_context>
chip_gen: v6e
topology: v6e:2x2x1
jax: 0.10.0
libtpu: 0.0.40
codegen_flags: <defaults>
</compile_context>

<pallas_src>
import functools

import jax
import jax.numpy as jnp
import numpy as np
from jax import lax
from jax.experimental import pallas as pl
from jax.experimental.pallas import tpu as pltpu


def _location_attention_kernel(x_ref, tri_ref, w_ref, b_ref, o_ref, *, acc_col):
    # x_ref:   (Bt, S, Hp) VMEM
    # tri_ref: (S, S)      VMEM (constant block index -> resident across steps)
    # w_ref:   (1, Hp)     VMEM (zeros in the padded lanes)
    # b_ref:   (1, 1)      SMEM (scalar bias)
    # o_ref:   (Bt, S, Hp) VMEM
    Bt, S, Hp = x_ref.shape

    tri = tri_ref[...]            # (S, S) strict lower triangular, f32
    w = w_ref[...]                # (1, Hp)
    bias = b_ref[0, 0]            # scalar via the sreg path

    def body(b, carry):
        xb = x_ref[b]                                              # (S, Hp)

        # Gate Linear(H -> 1) + exp on the VPU/XLU/EUP (MXU stays free).
        # NOTE: un-stabilized exp, by design, for PyTorch parity.
        logits = jnp.sum(xb * w, axis=-1, keepdims=True) + bias    # (S, 1)
        av = jnp.exp(logits)                                       # (S, 1)

        # Scale rows by the gate, then one MXU matmul against the shared
        # triangular constant: ob[i, h] = sum_{j<i} av[j] * x[j, h].
        y = xb * av                                                # (S, Hp)
        ob = jnp.dot(tri, y, preferred_element_type=jnp.float32)   # (S, Hp)

        if acc_col is not None:
            # Column `acc_col` of x is a constant 1.0 (set in the wrapper), so
            # that lane of the matmul result is exactly sum_{j<i} av[j].
            accum = ob[:, acc_col:acc_col + 1] + 1e-10             # (S, 1)
        else:
            # No padded lane available (H already a lane multiple): small
            # MXU matvec against the same resident triangular constant.
            accum = jnp.dot(tri, av, preferred_element_type=jnp.float32) + 1e-10

        # Normalization deferred until after the matmul (linear, so exact).
        o_ref[b] = (ob * (1.0 / accum)).astype(o_ref.dtype)
        return carry

    lax.fori_loop(0, Bt, body, 0, unroll=Bt <= 8)


def _vmem_budget_bytes():
    """Generation-aware scoped-VMEM budget (v7x: 64 MiB; v5e/v6e: 128 MiB)."""
    try:
        cap = int(pltpu.get_tpu_info().vmem_capacity_bytes)
    except Exception:
        cap = 64 << 20                      # conservative default (v7x per-TC)
    return min(int(cap * 0.6), 96 << 20)


def _choose_block_b(B, S, Hp, budget):
    """Batch elements folded per grid step, accounting for double-buffering."""
    # Pallas keeps 2 VMEM buffers each for the x and out blocks; add the y /
    # matmul intermediates live during compute. All f32.
    per_b = 4 * S * Hp * 6
    fixed = 2 * 4 * S * S + (256 << 10)     # resident TRI + slack
    bt = max(1, min(B, (budget - fixed) // max(per_b, 1)))
    # Keep >= 2 grid steps on the "parallel" batch axis when possible so both
    # v7x TensorCores get work; on 1-TC chips the extra step costs ~0.35 us.
    if bt == B and B >= 2:
        bt = B // 2
    while B % bt:
        bt -= 1
    return bt


def location_attention(x, weight, bias, *, block_b=None):
    """x: (B, S, H) f32; weight: (1, H) f32; bias: (1,) f32 -> (B, S, H) f32."""
    B, S, H = x.shape

    # Pad hidden to a lane multiple so every load/store is lane-dense. The
    # first padded column is set to 1.0 so the main matmul also produces the
    # denominator for free in an otherwise-wasted lane.
    Hp = ((H + 127) // 128) * 128
    if Hp != H:
        pad = Hp - H
        ones = jnp.ones((B, S, 1), x.dtype)
        if pad > 1:
            x_p = jnp.concatenate(
                [x, ones, jnp.zeros((B, S, pad - 1), x.dtype)], axis=-1)
        else:
            x_p = jnp.concatenate([x, ones], axis=-1)
        w_p = jnp.pad(weight, ((0, 0), (0, pad)))   # zero weight on pad lanes
        acc_col = H
    else:
        x_p, w_p, acc_col = x, weight, None

    tri = jnp.tril(jnp.ones((S, S), jnp.float32), k=-1)   # strict lower tri
    bias2d = bias.reshape(1, 1).astype(jnp.float32)

    budget = _vmem_budget_bytes()
    if block_b is None:
        block_b = _choose_block_b(B, S, Hp, budget)
    assert B % block_b == 0

    kernel = functools.partial(_location_attention_kernel, acc_col=acc_col)

    out = pl.pallas_call(
        kernel,
        out_shape=jax.ShapeDtypeStruct((B, S, Hp), x.dtype),
        grid=(B // block_b,),
        in_specs=[
            pl.BlockSpec((block_b, S, Hp), lambda b: (b, 0, 0)),
            pl.BlockSpec((S, S), lambda b: (0, 0)),              # resident const
            pl.BlockSpec((1, Hp), lambda b: (0, 0)),
            pl.BlockSpec(memory_space=pltpu.MemorySpace.SMEM),   # scalar bias
        ],
        out_specs=pl.BlockSpec((block_b, S, Hp), lambda b: (b, 0, 0)),
        compiler_params=pltpu.CompilerParams(
            dimension_semantics=("parallel",),
            vmem_limit_bytes=budget,
        ),
    )(x_p, tri, w_p, bias2d)

    if Hp != H:
        # Drops the padded lanes (including the fused-accum lane). In a fused
        # pipeline, return the padded slab and slice in the consumer instead.
        out = out[..., :H]
    return out


def _reference(x, weight, bias):
    # Pure-JAX re-implementation of the PyTorch forward for verification.
    B, S, H = x.shape
    av = jnp.exp(x.reshape(B * S, H) @ weight.T + bias).reshape(B, 1, S)   # (B,1,S)
    flag = jnp.triu(jnp.ones((S, S), jnp.float32), k=1).T[None]            # (1,S,S)
    accum = jnp.sum(av * flag, axis=-1, keepdims=True) + 1e-10             # (B,S,1)
    w = (av * flag) / accum                                                # (B,S,S)
    return jnp.sum(w[..., None] * x[:, None], axis=2)                      # (B,S,H)


if __name__ == "__main__":
    B, S, H = 2, 8, 32

    key = jax.random.PRNGKey(0)
    k_x, k_w, k_b = jax.random.split(key, 3)

    x = jax.random.normal(k_x, (B, S, H), dtype=jnp.float32)

    # Deterministic nn.Linear(H, 1)-style init: U(-1/sqrt(H), 1/sqrt(H))
    bound = 1.0 / np.sqrt(H)
    weight = jax.random.uniform(k_w, (1, H), jnp.float32, -bound, bound)
    bias = jax.random.uniform(k_b, (1,), jnp.float32, -bound, bound)

    out = location_attention(x, weight, bias)
    out = jax.block_until_ready(out)

    ref = _reference(x, weight, bias)
    assert out.shape == (B, S, H)
    np.testing.assert_allclose(np.asarray(out), np.asarray(ref), rtol=1e-5, atol=1e-5)

    print("KERNEL_OK")
</pallas_src>

<mosaic_0001>
module attributes {stable_mosaic.version = 11 : i64} {
  func.func @_location_attention_kernel(%arg0: i32, %arg1: memref<1x8x128xf32, #tpu.memory_space<vmem>>, %arg2: memref<8x8xf32, #tpu.memory_space<vmem>>, %arg3: memref<1x128xf32, #tpu.memory_space<vmem>>, %arg4: memref<1x1xf32, #tpu.memory_space<smem>>, %arg5: memref<1x8x128xf32, #tpu.memory_space<vmem>>) attributes {dimension_semantics = [#tpu.dimension_semantics<parallel>], iteration_bounds = array<i64: 2>, scalar_prefetch = 0 : i64, scratch_operands = 0 : i64, tpu.core_type = #tpu.core_type<tc>, window_params = [{transform_indices = @transform_0, window_bounds = array<i64: 1, 8, 128>}, {pipeline_mode = #tpu.pipeline_mode<synchronous>, transform_indices = @transform_1, window_bounds = array<i64: 8, 8>}, {pipeline_mode = #tpu.pipeline_mode<synchronous>, transform_indices = @transform_2, window_bounds = array<i64: 1, 128>}, {transform_indices = @transform_3, window_bounds = array<i64: 1, 1>}, {transform_indices = @transform_4, window_bounds = array<i64: 1, 8, 128>}]} {
    %c0 = arith.constant 0 : index
    %c0_0 = arith.constant 0 : index
    %0 = vector.load %arg2[%c0, %c0_0] : memref<8x8xf32, #tpu.memory_space<vmem>>, vector<8x8xf32>
    %c0_1 = arith.constant 0 : index
    %c0_2 = arith.constant 0 : index
    %1 = vector.load %arg3[%c0_1, %c0_2] : memref<1x128xf32, #tpu.memory_space<vmem>>, vector<1x128xf32>
    %c0_3 = arith.constant 0 : index
    %c0_4 = arith.constant 0 : index
    %2 = memref.load %arg4[%c0_3, %c0_4] : memref<1x1xf32, #tpu.memory_space<smem>>
    %c0_i32 = arith.constant 0 : i32
    %3 = arith.index_cast %c0_i32 : i32 to index
    %c0_5 = arith.constant 0 : index
    %c0_6 = arith.constant 0 : index
    %4 = vector.load %arg1[%3, %c0_5, %c0_6] : memref<1x8x128xf32, #tpu.memory_space<vmem>>, vector<1x8x128xf32>
    %5 = vector.shape_cast %4 : vector<1x8x128xf32> to vector<8x128xf32>
    %6 = vector.broadcast %1 : vector<1x128xf32> to vector<8x128xf32>
    %7 = arith.mulf %5, %6 : vector<8x128xf32>
    %cst = arith.constant dense<0.000000e+00> : vector<8xf32>
    %8 = vector.multi_reduction <add>, %7, %cst [1] : vector<8x128xf32> to vector<8xf32>
    %9 = vector.shape_cast %8 : vector<8xf32> to vector<8x1xf32>
    %10 = vector.broadcast %2 : f32 to vector<8x1xf32>
    %11 = arith.addf %9, %10 : vector<8x1xf32>
    %12 = math.exp %11 : vector<8x1xf32>
    %13 = vector.broadcast %12 : vector<8x1xf32> to vector<8x128xf32>
    %14 = arith.mulf %5, %13 : vector<8x128xf32>
    %cst_7 = arith.constant dense<0.000000e+00> : vector<8x128xf32>
    %15 = tpu.matmul %0, %14, %cst_7 {dimension_numbers = #tpu.dot_dimension_numbers<[1], [0], [0], [1], [0, 0, 1, 1], [], []>} : vector<8x8xf32>, vector<8x128xf32>, vector<8x128xf32> -> vector<8x128xf32>
    %16 = vector.extract_strided_slice %15 {offsets = [0, 32], sizes = [8, 1], strides = [1, 1]} : vector<8x128xf32> to vector<8x1xf32>
    %cst_8 = arith.constant 1.000000e-10 : f32
    %17 = vector.broadcast %cst_8 : f32 to vector<8x1xf32>
    %18 = arith.addf %16, %17 : vector<8x1xf32>
    %cst_9 = arith.constant 1.000000e+00 : f32
    %19 = vector.broadcast %cst_9 : f32 to vector<8x1xf32>
    %20 = arith.divf %19, %18 : vector<8x1xf32>
    %21 = vector.broadcast %20 : vector<8x1xf32> to vector<8x128xf32>
    %22 = arith.mulf %15, %21 : vector<8x128xf32>
    %23 = arith.index_cast %c0_i32 : i32 to index
    %c0_10 = arith.constant 0 : index
    %c0_11 = arith.constant 0 : index
    %24 = vector.load %arg5[%23, %c0_10, %c0_11] : memref<1x8x128xf32, #tpu.memory_space<vmem>>, vector<1x8x128xf32>
    %25 = vector.shape_cast %24 : vector<1x8x128xf32> to vector<8x128xf32>
    %26 = vector.shape_cast %22 : vector<8x128xf32> to vector<1x8x128xf32>
    tpu.vector_store %arg5[%23, %c0_10, %c0_11], %26 {strides = array<i32>} : memref<1x8x128xf32, #tpu.memory_space<vmem>>, vector<1x8x128xf32>,
    %c1_i32 = arith.constant 1 : i32
    return
  }
  func.func @transform_0(%arg0: i32) -> (i32, i32, i32) {
    %c0_i32 = arith.constant 0 : i32
    %c0_i32_0 = arith.constant 0 : i32
    %c0_i32_1 = arith.constant 0 : i32
    return %arg0, %c0_i32, %c0_i32_0 : i32, i32, i32
  }
  func.func @transform_1(%arg0: i32) -> (i32, i32) {
    %c0_i32 = arith.constant 0 : i32
    %c0_i32_0 = arith.constant 0 : i32
    %c0_i32_1 = arith.constant 0 : i32
    return %c0_i32, %c0_i32_0 : i32, i32
  }
  func.func @transform_2(%arg0: i32) -> (i32, i32) {
    %c0_i32 = arith.constant 0 : i32
    %c0_i32_0 = arith.constant 0 : i32
    %c0_i32_1 = arith.constant 0 : i32
    return %c0_i32, %c0_i32_0 : i32, i32
  }
  func.func @transform_3(%arg0: i32) -> (i32, i32) {
    %c0_i32 = arith.constant 0 : i32
    %c0_i32_0 = arith.constant 0 : i32
    %c0_i32_1 = arith.constant 0 : i32
    return %c0_i32, %c0_i32_0 : i32, i32
  }
  func.func @transform_4(%arg0: i32) -> (i32, i32, i32) {
    %c0_i32 = arith.constant 0 : i32
    %c0_i32_0 = arith.constant 0 : i32
    %c0_i32_1 = arith.constant 0 : i32
    return %arg0, %c0_i32, %c0_i32_0 : i32, i32, i32
  }
}

</mosaic_0001>

<llo_original>
// kernel: tpu_custom_call.1
$region0: #{tpu_custom_call.1}
  #allocation0 [shape = 'u32[]', space=smem, size = 0x4, offset = 0x4, fixed_abs, tag = 'smem constant byte address 0x4 - core index']
  #allocation1 [shape = 'u32[144,128]{1,0:T(1,128)}', space=vmem, size = 0x12000, scoped, tag = 'internal scratch']
  #allocation2 [shape = 'f32[1,1]{1,0:T(1,128)S(6)}', space=smem, size = 0x200, scoped, tag = 'scoped memory for tpu_custom_call.1']
  %s0 = inlined_call_operand.hbm [shape: f32[2,8,128], index: 0, kind: input, shape index: {}]
  %s1 = inlined_call_operand.hbm [shape: f32[8,8], index: 1, kind: input, shape index: {}]
  %s2 = inlined_call_operand.vmem [shape: f32[1,128], index: 2, kind: input, shape index: {}]
  %s3 = inlined_call_operand.<no memory space> [shape: f32[1,1], index: 3, kind: input, shape index: {}]
  %s4 = inlined_call_operand.hbm [shape: f32[2,8,128], index: 4, kind: output, shape index: {}]
  %s5 = sld [smem:[#allocation0]]
  $region57: #{tpu_custom_call.1} parent=0
    _
  %s7 = ssub.s32 1, %s5
  %s8 = scalar_select 0, %s7, %s5
  %9 = sst [smem:[#allocation2]] %s3
  $region1: #{tpu_custom_call.1} parent=0
    #allocation3 [shape = 'u8[8192]{0}', space=vmem, size = 0x2000, scoped, tag = 'input window, operand 0']
    #allocation4 [shape = 's32[2]{0}', space=sflag, size = 0x8, scoped, tag = 'scoped memory for tpu_custom_call.1']
    #allocation5 [shape = 's32[2]{0}', space=sflag, size = 0x8, scoped, tag = 'scoped memory for tpu_custom_call.1']
    #allocation6 [shape = 'u8[4096]{0}', space=vmem, size = 0x1000, scoped, tag = 'input window, operand 1, single buffered']
    #allocation7 [shape = 's32[1]{0}', space=sflag, size = 0x4, scoped, tag = 'scoped memory for tpu_custom_call.1']
    #allocation8 [shape = 'u8[8192]{0}', space=vmem, size = 0x2000, scoped, tag = 'output window, operand 0']
    %10 = vsyncpa [#allocation4], 0
    %s11 = scalar_lea.sflag [#allocation4], 1
    %12 = vsyncpa %s11, 0
    %13 = vsyncpa [#allocation7], 0
    %14 = vsyncpa [#allocation5], 0
    %s15 = scalar_lea.sflag [#allocation5], 1
    %16 = vsyncpa %s15, 0
    loop: start=0, step=1, limit=4
    $region2: #{tpu_custom_call.1} parent=1 // loop_pre_header
      _
    $region3: #{tpu_custom_call.1} parent=1 // loop_header
      %s18 = sphi 0, %s22
      %p19 = scmp.ge.s32.totalorder %s18, 4
      %s28 = sphi 0, %s30
      %s31 = sphi 0, %s28
      %s32 = sphi 0, %s31
      %s48 = sphi 0, %s32
      %s52 = sphi 0, %s52
      %s54 = sphi 0, %s52
      %s55 = sphi 0, %s54
      %s69 = sphi 0, %s55
      %s73 = sphi 0, %s73
      %s75 = sphi 0, %s73
      %s76 = sphi 0, %s75
      %s90 = sphi 0, %s76
      %s94 = sphi 0, %s94
      %s96 = sphi 0, %s94
      %s97 = sphi 0, %s96
      %s111 = sphi 0, %s97
      %s117 = sphi 0, %s119
      %s120 = sphi 0, %s117
      %s121 = sphi 0, %s120
      %s137 = sphi 0, %s121
    $region4: #{tpu_custom_call.1} parent=1 // loop_header_branch
      %21 = sbr.rel (%p19) target = $region8
    $region5: #{tpu_custom_call.1} parent=1 // loop_body
      %s23 = ssub.s32 %s18, 1
      %s24 = ssub.s32 %s18, 2
      %s25 = sadd.s32 %s18, 1
      %s26 = ssub.s32 %s18, %s25
      %p27 = scmp.eq.s32.totalorder %s26, 0
      %s29 = sadd.s32 %s28, 1
      %s30 = scalar_select %p27, %s28, %s29
      %p33 = pneg %p27
      %p34 = scmp.eq.s32.totalorder %s18, 1
      %p35 = por %p33, %p34
      %p36 = scmp.ne.s32.totalorder %s28, %s31
      %p37 = scmp.eq.s32.totalorder %s18, 0
      %p38 = por %p36, %p37
      %p39 = scmp.ne.s32.totalorder %s28, %s31
      %p40 = scmp.eq.s32.totalorder %s23, 1
      %p41 = por %p39, %p40
      %p42 = scmp.ne.s32.totalorder %s31, %s32
      %p43 = scmp.eq.s32.totalorder %s23, 0
      %p44 = por %p42, %p43
      %p45 = scmp.ne.s32.totalorder %s31, %s32
      %p46 = scmp.eq.s32.totalorder %s24, 1
      %p47 = por %p45, %p46
      %p49 = scmp.ne.s32.totalorder %s32, %s48
      %p50 = scmp.eq.s32.totalorder %s24, 0
      %p51 = por %p49, %p50
      %s53 = sadd.s32 %s52, 1
      %p56 = scmp.eq.s32.totalorder %s18, 1
      %p57 = scmp.ne.s32.totalorder %s52, %s54
      %p58 = scmp.eq.s32.totalorder %s18, 0
      %p59 = por %p57, %p58
      %p60 = scmp.ne.s32.totalorder %s52, %s54
      %p61 = scmp.eq.s32.totalorder %s23, 1
      %p62 = por %p60, %p61
      %p63 = scmp.ne.s32.totalorder %s54, %s55
      %p64 = scmp.eq.s32.totalorder %s23, 0
      %p65 = por %p63, %p64
      %p66 = scmp.ne.s32.totalorder %s54, %s55
      %p67 = scmp.eq.s32.totalorder %s24, 1
      %p68 = por %p66, %p67
      %p70 = scmp.ne.s32.totalorder %s55, %s69
      %p71 = scmp.eq.s32.totalorder %s24, 0
      %p72 = por %p70, %p71
      %s74 = sadd.s32 %s73, 1
      %p77 = scmp.eq.s32.totalorder %s18, 1
      %p78 = scmp.ne.s32.totalorder %s73, %s75
      %p79 = scmp.eq.s32.totalorder %s18, 0
      %p80 = por %p78, %p79
      %p81 = scmp.ne.s32.totalorder %s73, %s75
      %p82 = scmp.eq.s32.totalorder %s23, 1
      %p83 = por %p81, %p82
      %p84 = scmp.ne.s32.totalorder %s75, %s76
      %p85 = scmp.eq.s32.totalorder %s23, 0
      %p86 = por %p84, %p85
      %p87 = scmp.ne.s32.totalorder %s75, %s76
      %p88 = scmp.eq.s32.totalorder %s24, 1
      %p89 = por %p87, %p88
      %p91 = scmp.ne.s32.totalorder %s76, %s90
      %p92 = scmp.eq.s32.totalorder %s24, 0
      %p93 = por %p91, %p92
      %s95 = sadd.s32 %s94, 1
      %p98 = scmp.eq.s32.totalorder %s18, 1
      %p99 = scmp.ne.s32.totalorder %s94, %s96
      %p100 = scmp.eq.s32.totalorder %s18, 0
      %p101 = por %p99, %p100
      %p102 = scmp.ne.s32.totalorder %s94, %s96
      %p103 = scmp.eq.s32.totalorder %s23, 1
      %p104 = por %p102, %p103
      %p105 = scmp.ne.s32.totalorder %s96, %s97
      %p106 = scmp.eq.s32.totalorder %s23, 0
      %p107 = por %p105, %p106
      %p108 = scmp.ne.s32.totalorder %s96, %s97
      %p109 = scmp.eq.s32.totalorder %s24, 1
      %p110 = por %p108, %p109
      %p112 = scmp.ne.s32.totalorder %s97, %s111
      %p113 = scmp.eq.s32.totalorder %s24, 0
      %p114 = por %p112, %p113
      %s115 = ssub.s32 %s18, %s25
      %p116 = scmp.eq.s32.totalorder %s115, 0
      %s118 = sadd.s32 %s117, 1
      %s119 = scalar_select %p116, %s117, %s118
      %p122 = pneg %p116
      %p123 = scmp.eq.s32.totalorder %s18, 1
      %p124 = por %p122, %p123
      %p125 = scmp.ne.s32.totalorder %s117, %s120
      %p126 = scmp.eq.s32.totalorder %s18, 0
      %p127 = por %p125, %p126
      %p128 = scmp.ne.s32.totalorder %s117, %s120
      %p129 = scmp.eq.s32.totalorder %s23, 1
      %p130 = por %p128, %p129
      %p131 = scmp.ne.s32.totalorder %s120, %s121
      %p132 = scmp.eq.s32.totalorder %s23, 0
      %p133 = por %p131, %p132
      %p134 = scmp.ne.s32.totalorder %s120, %s121
      %p135 = scmp.eq.s32.totalorder %s24, 1
      %p136 = por %p134, %p135
      %p138 = scmp.ne.s32.totalorder %s121, %s137
      %p139 = scmp.eq.s32.totalorder %s24, 0
      %p140 = por %p138, %p139
      %p141 = scmp.le.s32.totalorder 1, %s18
      %p142 = scmp.lt.s32.totalorder %s18, 3
      %p143 = pnand %p141, %p142
      %p144 = pneg %p143
      // Predicated region
      $region9: #{tpu_custom_call.1} parent=5 // pred_check
        _
      $region10: #{tpu_custom_call.1} parent=5 // pred_check_branch
        %146 = sbr.rel (%p143) target = $region12
      $region11: #{tpu_custom_call.1} parent=5 // pred_region
        %s147 = ssub.s32 %s18, 1
        // Predicated region
        $region13: #{tpu_custom_call.1} parent=11 // pred_check
          %p148 = pneg %p65
        $region14: #{tpu_custom_call.1} parent=11 // pred_check_branch
          %150 = sbr.rel (%p148) target = $region16
        $region15: #{tpu_custom_call.1} parent=11 // pred_region
          %s152 = ssub.s32 128, 128
          %153 = vsyncadd [#allocation7], %s152
          %s155 = sshll.u32 [#allocation6], 4
          %s156 = int_to_ptr.vmem [resolvable:$true] %s155
          %158 = dma.hbm_to_vmem [thread:$0]  %s1, 128, %s156, [#allocation7]
        $region16: #{tpu_custom_call.1} parent=11 // pred_fallthru
          _
        // Predicated region
        $region17: #{tpu_custom_call.1} parent=11 // pred_check
          %p159 = pneg %p86
        $region18: #{tpu_custom_call.1} parent=11 // pred_check_branch
          %161 = sbr.rel (%p159) target = $region20
        $region19: #{tpu_custom_call.1} parent=11 // pred_region
          _
        $region20: #{tpu_custom_call.1} parent=11 // pred_fallthru
          _
        // Predicated region
        $region21: #{tpu_custom_call.1} parent=11 // pred_check
          %p162 = pneg %p107
        $region22: #{tpu_custom_call.1} parent=11 // pred_check_branch
          %164 = sbr.rel (%p162) target = $region24
        $region23: #{tpu_custom_call.1} parent=11 // pred_region
          _
        $region24: #{tpu_custom_call.1} parent=11 // pred_fallthru
          _
      $region12: #{tpu_custom_call.1} parent=5 // pred_fallthru
        _
      %p165 = scmp.lt.s32.totalorder %s18, 2
      // Predicated region
      $region25: #{tpu_custom_call.1} parent=5 // pred_check
        %p166 = pneg %p165
      $region26: #{tpu_custom_call.1} parent=5 // pred_check_branch
        %168 = sbr.rel (%p166) target = $region28
      $region27: #{tpu_custom_call.1} parent=5 // pred_region
        // Predicated region
        $region29: #{tpu_custom_call.1} parent=27 // pred_check
          %p169 = pneg %p38
        $region30: #{tpu_custom_call.1} parent=27 // pred_check_branch
          %171 = sbr.rel (%p169) target = $region32
        $region31: #{tpu_custom_call.1} parent=27 // pred_region
          %s172 = sand.u32 %s28, 1
          %s173 = scalar_lea.sflag [#allocation4], %s172
          %s174 = sand.u32 %s28, 1
          %s175 = smul.addr %s174, 8
          %s176 = scalar_lea.vmem [#allocation3], %s175
          %s178 = ssub.s32 128, 128
          %179 = vsyncadd %s173, %s178
          %s180 = smul.addr %s18, 128
          %s181 = scalar_lea.hbm %s0, %s180
          %s183 = sshll.u32 %s176, 4
          %s184 = int_to_ptr.vmem [resolvable:$true] %s183
          %186 = dma.hbm_to_vmem [thread:$0]  %s181, 128, %s184, %s173
        $region32: #{tpu_custom_call.1} parent=27 // pred_fallthru
          _
      $region28: #{tpu_custom_call.1} parent=5 // pred_fallthru
        _
      %p187 = scmp.le.s32.totalorder 1, %s18
      %p188 = scmp.lt.s32.totalorder %s18, 3
      %p189 = pnand %p187, %p188
      %p190 = pneg %p189
      // Predicated region
      $region33: #{tpu_custom_call.1} parent=5 // pred_check
        _
      $region34: #{tpu_custom_call.1} parent=5 // pred_check_branch
        %192 = sbr.rel (%p189) target = $region36
      $region35: #{tpu_custom_call.1} parent=5 // pred_region
        %s193 = ssub.s32 %s18, 1
        %s194 = sand.u32 %s31, 1
        %s195 = scalar_lea.sflag [#allocation4], %s194
        %s196 = sand.u32 %s31, 1
        %s197 = smul.addr %s196, 8
        %s198 = scalar_lea.vmem [#allocation3], %s197
        // Predicated region
        $region37: #{tpu_custom_call.1} parent=35 // pred_check
          %p199 = pneg %p44
        $region38: #{tpu_custom_call.1} parent=35 // pred_check_branch
          %201 = sbr.rel (%p199) target = $region40
        $region39: #{tpu_custom_call.1} parent=35 // pred_region
          %202 = dma.done %s195, 128
        $region40: #{tpu_custom_call.1} parent=35 // pred_fallthru
          _
        // Predicated region
        $region41: #{tpu_custom_call.1} parent=35 // pred_check
          %p203 = pneg %p65
        $region42: #{tpu_custom_call.1} parent=35 // pred_check_branch
          %205 = sbr.rel (%p203) target = $region44
        $region43: #{tpu_custom_call.1} parent=35 // pred_region
          %206 = dma.done [#allocation7], 128
        $region44: #{tpu_custom_call.1} parent=35 // pred_fallthru
          _
        %s207 = sand.u32 %s31, 1
        %s208 = scalar_lea.sflag [#allocation4], %s207
        %s209 = sand.u32 %s31, 1
        %s210 = smul.addr %s209, 8
        %s211 = scalar_lea.vmem [#allocation3], %s210
        %p212 = pneg %p44
        %p213 = pneg %p41
        %p214 = pneg %p65
        %p215 = pneg %p62
        %p216 = pneg %p86
        %p217 = pneg %p83
        %p218 = pneg %p107
        %p219 = pneg %p104
        %p220 = pneg %p133
        %p221 = pneg %p130
        %s222 = sand.u32 %s120, 1
        %s223 = scalar_lea.sflag [#allocation5], %s222
        %s224 = sand.u32 %s120, 1
        %s225 = smul.addr %s224, 8
        %s226 = scalar_lea.vmem [#allocation8], %s225
        %v227 = vld [vmem:[#allocation6] sm:$0xff]
        %v228 = vld [vmem:[%s2] sm:$0x1]
        %s229 = sld [smem:[#allocation2]]
        %v230 = vld [vmem:[%s198] sm:$0xff]
        %v232 = vlaneseq
        %v233 = vshrl.u32 %v232, 7
        %v234 = vsub.s32 0, %v233
        %v235 = vrot.slane %v228, %v234
        %v237 = vmul.f32 %v230, %v235
        %238 = vadd.xlane.f32.xlu0 %v237
        %v239 = vpop.xlane.xlu0 %238
        %v240 = vstv %s229
        %v241 = vadd.f32 %v239, %v240
        %v242 = vmul.f32 %v241, 1.442695
        %v243 = vpow.pop %v242
        %v244 = vmul.f32 %v230, %v243
        %vm245 = vcmask 64512
        %v247 = vsel %vm245, %v227, 0
        %249 = vmatprep.subr.mxu0 0.0
        %250 = vmatpush1.msra.mxu0 0.0
        %251 = vmatprep.subr.mxu0 0.0
        %252 = vmatpush1.msra.mxu0 0.0
        %253 = vmatprep.subr.mxu0 0.0
        %254 = vmatpush1.msra.mxu0 0.0
        %255 = vmatprep.subr.mxu0 0.0
        %256 = vmatpush1.msra.mxu0 0.0
        %257 = vmatprep.subr.mxu0 0.0
        %258 = vmatpush1.msra.mxu0 0.0
        %259 = vmatprep.subr.mxu0 0.0
        %260 = vmatpush1.msra.mxu0 0.0
        %261 = vmatprep.subr.mxu0 0.0
        %262 = vmatpush1.msra.mxu0 0.0
        %263 = vmatprep.subr.mxu0 0.0
        %264 = vmatpush1.msra.mxu0 0.0
        %265 = vmatprep.subr.mxu0 0.0
        %266 = vmatpush1.msra.mxu0 0.0
        %267 = vmatprep.subr.mxu0 0.0
        %268 = vmatpush1.msra.mxu0 0.0
        %269 = vmatprep.subr.mxu0 0.0
        %270 = vmatpush1.msra.mxu0 0.0
        %271 = vmatprep.subr.mxu0 0.0
        %272 = vmatpush1.msra.mxu0 0.0
        %273 = vmatprep.subr.mxu0 0.0
        %274 = vmatpush1.msra.mxu0 0.0
        %275 = vmatprep.subr.mxu0 0.0
        %276 = vmatpush1.msra.mxu0 0.0
        %277 = vmatprep.subr.mxu0 0.0
        %278 = vmatpush1.msra.mxu0 0.0
        %279 = vmatprep.subr.mxu0 0.0
        %280 = vmatpush1.msra.mxu0 %v244
        %281 = vmatprep.subr.mxu0 0.0
        %282 = vmatpush2.msra.mxu0 0.0
        %283 = vmatprep.subr.mxu0 0.0
        %284 = vmatpush2.msra.mxu0 0.0
        %285 = vmatprep.subr.mxu0 0.0
        %286 = vmatpush2.msra.mxu0 0.0
        %287 = vmatprep.subr.mxu0 0.0
        %288 = vmatpush2.msra.mxu0 0.0
        %289 = vmatprep.subr.mxu0 0.0
        %290 = vmatpush2.msra.mxu0 0.0
        %291 = vmatprep.subr.mxu0 0.0
        %292 = vmatpush2.msra.mxu0 0.0
        %293 = vmatprep.subr.mxu0 0.0
        %294 = vmatpush2.msra.mxu0 0.0
        %295 = vmatprep.subr.mxu0 0.0
        %296 = vmatpush2.msra.mxu0 0.0
        %297 = vmatprep.subr.mxu0 0.0
        %298 = vmatpush2.msra.mxu0 0.0
        %299 = vmatprep.subr.mxu0 0.0
        %300 = vmatpush2.msra.mxu0 0.0
        %301 = vmatprep.subr.mxu0 0.0
        %302 = vmatpush2.msra.mxu0 0.0
        %303 = vmatprep.subr.mxu0 0.0
        %304 = vmatpush2.msra.mxu0 0.0
        %305 = vmatprep.subr.mxu0 0.0
        %306 = vmatpush2.msra.mxu0 0.0
        %307 = vmatprep.subr.mxu0 0.0
        %308 = vmatpush2.msra.mxu0 0.0
        %309 = vmatprep.subr.mxu0 0.0
        %310 = vmatpush2.msra.mxu0 0.0
        %311 = vmatprep.subr.mxu0 0.0
        %312 = vmatpush2.msra.mxu0 0.0
        %313 = vmatprep.mubr.f32.mxu0 0.0
        %314 = vmatmul.mubr.f32.gmra.mxu0 %v247
        %v315 = vpop.f32.mrf.mxu0
        %v316 = vadd.f32 0.0, %v315
        %v317 = vpop.f32.mrf.mxu0
        %318 = vdwg.mxu0
        %v319 = vadd.f32 %v316, 1e-10
        %v320 = vrcp.pop %v319
        %v321 = vmul.f32 1.0, %v320
        %323 = vset.pattern.permute.xlu0 32
        %324 = vperm.xlu0 %323, %v321
        %v325 = vpop.permute.xlu0 %324
        %v327 = vmul.f32 %v316, %v325
        %328 = vst [vmem:[%s226] sm:$0xff] %v327
        %s329 = sand.u32 %s120, 1
        %s330 = scalar_lea.sflag [#allocation5], %s329
        %s331 = sand.u32 %s120, 1
        %s332 = smul.addr %s331, 8
        %s333 = scalar_lea.vmem [#allocation8], %s332
        // Predicated region
        $region45: #{tpu_custom_call.1} parent=35 // pred_check
          %p334 = pneg %p130
        $region46: #{tpu_custom_call.1} parent=35 // pred_check_branch
          %336 = sbr.rel (%p334) target = $region48
        $region47: #{tpu_custom_call.1} parent=35 // pred_region
          %s338 = ssub.s32 128, 128
          %339 = vsyncadd %s330, %s338
          %s340 = smul.addr %s23, 128
          %s341 = scalar_lea.hbm %s4, %s340
          %s343 = sshll.u32 %s333, 4
          %s344 = int_to_ptr.vmem [resolvable:$true] %s343
          %346 = dma.vmem_to_hbm [thread:$0]  %s344, 128, %s341, %s330
        $region48: #{tpu_custom_call.1} parent=35 // pred_fallthru
          _
      $region36: #{tpu_custom_call.1} parent=5 // pred_fallthru
        _
      %p347 = scmp.le.s32.totalorder 2, %s18
      // Predicated region
      $region49: #{tpu_custom_call.1} parent=5 // pred_check
        %p348 = pneg %p347
      $region50: #{tpu_custom_call.1} parent=5 // pred_check_branch
        %350 = sbr.rel (%p348) target = $region52
      $region51: #{tpu_custom_call.1} parent=5 // pred_region
        %s351 = ssub.s32 %s18, 2
        // Predicated region
        $region53: #{tpu_custom_call.1} parent=51 // pred_check
          %p352 = pneg %p136
        $region54: #{tpu_custom_call.1} parent=51 // pred_check_branch
          %354 = sbr.rel (%p352) target = $region56
        $region55: #{tpu_custom_call.1} parent=51 // pred_region
          %s355 = sand.u32 %s121, 1
          %s356 = scalar_lea.sflag [#allocation5], %s355
          %s357 = sand.u32 %s121, 1
          %s358 = smul.addr %s357, 8
          %s359 = scalar_lea.vmem [#allocation8], %s358
          %360 = dma.done %s356, 128
        $region56: #{tpu_custom_call.1} parent=51 // pred_fallthru
          _
      $region52: #{tpu_custom_call.1} parent=5 // pred_fallthru
        _
    $region6: #{tpu_custom_call.1} parent=1 // loop_footer
      %s22 = sadd.s32 1, %s18
    $region7: #{tpu_custom_call.1} parent=1 // loop_footer_branch
      %17 = sbr.rel target = $region3
    $region8: #{tpu_custom_call.1} parent=1 // loop_exit
      _
    %361 = vsyncpa [#allocation4], 1
    %s362 = scalar_lea.sflag [#allocation4], 1
    %363 = vsyncpa %s362, 1
    %364 = vsyncpa [#allocation7], 1
    %365 = vsyncpa [#allocation5], 1
    %s366 = scalar_lea.sflag [#allocation5], 1
    %367 = vsyncpa %s366, 1

</llo_original>
